<compile_context>
chip_gen: v6e
topology: v6e:2x2x1
jax: 0.10.0
libtpu: 0.0.40
codegen_flags: <defaults>
</compile_context>

<pallas_src>
import jax
import jax.numpy as jnp
from jax.experimental import pallas as pl
from jax.experimental.pallas import tpu as pltpu


_LANE = 128
_TARGET_BLOCK_BYTES = 1 << 20      # ~1 MiB output blocks: 85%+ of HBM write roofline
_MAX_BLOCK_BYTES = 4 << 20         # 2x double-buffered blocks stay well under v7x VMEM
_TINY_OUTPUT_BYTES = 256 << 10     # below this, XLA broadcast_to is already roofline


def _replicate_kernel(pars_ref, out_ref):
    # pars_ref: (1, Lp) VMEM tile, identical block index every grid step
    #           (Pallas keeps it resident, no per-step input DMA).
    # out_ref : (S_BLK, Lp) lane-dense output tile for this block of samples.
    out_ref[...] = jnp.broadcast_to(pars_ref[...], out_ref.shape)


def base_forward_model(num_samples: int, pars: jax.Array, *,
                       force_pallas: bool = False) -> jax.Array:
    """Pallas equivalent of BaseForwardModel.forward(num_samples, pars).

    Returns `pars` ([B, P]) replicated across a leading sample axis:
    out[s] == pars for every s in [0, num_samples).
    """
    B, P = pars.shape
    dtype = pars.dtype
    itemsize = jnp.dtype(dtype).itemsize
    L = B * P
    out_bytes = num_samples * L * itemsize

    # Tiny / degenerate problems: a Pallas launch is pure overhead.
    if num_samples == 0 or (not force_pallas and out_bytes < _TINY_OUTPUT_BYTES):
        return jnp.broadcast_to(pars[None], (num_samples, B, P))

    # Lane-dense layout: flatten (B, P) -> L and pad the last dim to a
    # multiple of 128 lanes so every store is a full-width (unmasked) vst.
    L_pad = max(_LANE, ((L + _LANE - 1) // _LANE) * _LANE)
    row_bytes = L_pad * itemsize

    # A single parameter row so large that an 8-sample block blows the VMEM
    # budget: fall back to XLA (pure bandwidth-bound broadcast anyway).
    if 8 * row_bytes > _MAX_BLOCK_BYTES and num_samples > 1:
        return jnp.broadcast_to(pars[None], (num_samples, B, P))

    # Sample-block size: target ~1 MiB output blocks, multiple of 8 sublanes,
    # or the full sample extent when that is smaller.
    s_blk = max(1, _TARGET_BLOCK_BYTES // row_bytes)
    if s_blk >= num_samples:
        s_blk = num_samples
    else:
        s_blk = max(8, (s_blk // 8) * 8)

    pars_flat = pars.reshape(1, L)
    if L_pad != L:
        pars_flat = jnp.pad(pars_flat, ((0, 0), (0, L_pad - L)))

    grid = (pl.cdiv(num_samples, s_blk),)

    out_padded = pl.pallas_call(
        _replicate_kernel,
        out_shape=jax.ShapeDtypeStruct((num_samples, L_pad), dtype),
        grid_spec=pltpu.PrefetchScalarGridSpec(
            num_scalar_prefetch=0,
            grid=grid,
            in_specs=[
                # Same (0, 0) block every step -> stays resident in VMEM.
                pl.BlockSpec((1, L_pad), lambda s: (0, 0)),
            ],
            out_specs=pl.BlockSpec((s_blk, L_pad), lambda s: (s, 0)),
        ),
        compiler_params=pltpu.CompilerParams(
            # Parallel sample-block axis: shards across v7x's 2 TensorCores;
            # no-op on v5e/v6e.
            dimension_semantics=("parallel",),
        ),
        cost_estimate=pl.CostEstimate(
            flops=0,
            transcendentals=0,
            bytes_accessed=num_samples * L_pad * itemsize + L_pad * itemsize,
        ),
    )(pars_flat)

    if L_pad != L:
        out_padded = out_padded[:, :L]
    return out_padded.reshape(num_samples, B, P)


if __name__ == "__main__":
    key = jax.random.PRNGKey(0)

    # Small, module-consistent shapes: batch=2, parameter dim=32.
    B, P = 2, 32
    pars = jax.random.normal(key, (B, P), dtype=jnp.float32)

    # 1) Small case through the Pallas path (forced, since it is tiny).
    num_samples = 4
    out = jax.block_until_ready(base_forward_model(num_samples, pars,
                                                   force_pallas=True))
    assert out.shape == (num_samples, B, P)
    assert bool(jnp.allclose(out, jnp.broadcast_to(pars[None], out.shape)))

    # 2) Default (tiny-problem) fast path.
    out_fast = jax.block_until_ready(base_forward_model(num_samples, pars))
    assert bool(jnp.allclose(out_fast, out))

    # 3) Larger sample count: exercises multi-block grid + partial last block.
    num_samples_big = 3000
    out_big = jax.block_until_ready(base_forward_model(num_samples_big, pars))
    assert out_big.shape == (num_samples_big, B, P)
    assert bool(jnp.allclose(out_big,
                             jnp.broadcast_to(pars[None], out_big.shape)))

    print("KERNEL_OK")
</pallas_src>

<mosaic_0001>
module attributes {stable_mosaic.version = 11 : i64} {
  func.func @_replicate_kernel(%arg0: i32, %arg1: memref<1x128xf32, #tpu.memory_space<vmem>>, %arg2: memref<4x128xf32, #tpu.memory_space<vmem>>) attributes {dimension_semantics = [#tpu.dimension_semantics<parallel>], iteration_bounds = array<i64: 1>, scalar_prefetch = 0 : i64, scratch_operands = 0 : i64, tpu.core_type = #tpu.core_type<tc>, window_params = [{pipeline_mode = #tpu.pipeline_mode<synchronous>, transform_indices = @transform_0, window_bounds = array<i64: 1, 128>}, {transform_indices = @transform_1, window_bounds = array<i64: 4, 128>}]} {
    %c0 = arith.constant 0 : index
    %c0_0 = arith.constant 0 : index
    %0 = vector.load %arg1[%c0, %c0_0] : memref<1x128xf32, #tpu.memory_space<vmem>>, vector<1x128xf32>
    %1 = vector.shape_cast %0 : vector<1x128xf32> to vector<1x128xf32>
    %2 = vector.broadcast %1 : vector<1x128xf32> to vector<4x128xf32>
    %c0_1 = arith.constant 0 : index
    %c0_2 = arith.constant 0 : index
    %3 = vector.load %arg2[%c0_1, %c0_2] : memref<4x128xf32, #tpu.memory_space<vmem>>, vector<4x128xf32>
    tpu.vector_store %arg2[%c0_1, %c0_2], %2 {strides = array<i32>} : memref<4x128xf32, #tpu.memory_space<vmem>>, vector<4x128xf32>,
    return
  }
  func.func @transform_0(%arg0: i32) -> (i32, i32) {
    %c0_i32 = arith.constant 0 : i32
    %c0_i32_0 = arith.constant 0 : i32
    %c0_i32_1 = arith.constant 0 : i32
    return %c0_i32, %c0_i32_0 : i32, i32
  }
  func.func @transform_1(%arg0: i32) -> (i32, i32) {
    %c0_i32 = arith.constant 0 : i32
    %c0_i32_0 = arith.constant 0 : i32
    return %arg0, %c0_i32 : i32, i32
  }
}

</mosaic_0001>

<llo_original>
// kernel: tpu_custom_call.1
$region0: #{tpu_custom_call.1}
  #allocation0 [shape = 'u32[]', space=smem, size = 0x4, offset = 0x4, fixed_abs, tag = 'smem constant byte address 0x4 - core index']
  #allocation1 [shape = 'u32[144,128]{1,0:T(1,128)}', space=vmem, size = 0x12000, scoped, tag = 'internal scratch']
  %s0 = inlined_call_operand.hbm [shape: f32[1,128], index: 0, kind: input, shape index: {}]
  %s1 = inlined_call_operand.hbm [shape: f32[4,128], index: 1, kind: output, shape index: {}]
  %s2 = sld [smem:[#allocation0]]
  $region18: #{tpu_custom_call.1} parent=0
    _
  %s4 = ssub.s32 1, %s2
  %s5 = scalar_select 0, %s4, %s2
  $region1: #{tpu_custom_call.1} parent=0
    #allocation2 [shape = 'u8[512]{0}', space=vmem, size = 0x400, scoped, tag = 'input window, operand 0, single buffered']
    #allocation3 [shape = 's32[1]{0}', space=sflag, size = 0x4, scoped, tag = 'scoped memory for tpu_custom_call.1']
    #allocation4 [shape = 's32[1]{0}', space=sflag, size = 0x4, scoped, tag = 'scoped memory for tpu_custom_call.1']
    #allocation5 [shape = 'u8[2048]{0}', space=vmem, size = 0x800, scoped, tag = 'output window, operand 0, single buffered']
    %6 = vsyncpa [#allocation3], 0
    %7 = vsyncpa [#allocation4], 0
    // Predicated region
    $region2: #{tpu_custom_call.1} parent=1 // pred_check
      _
    $region3: #{tpu_custom_call.1} parent=1 // pred_check_branch
      %9 = sbr.rel (0) target = $region5
    $region4: #{tpu_custom_call.1} parent=1 // pred_region
      %s11 = ssub.s32 16, 16
      %12 = vsyncadd [#allocation3], %s11
      %s14 = sshll.u32 [#allocation2], 4
      %s15 = int_to_ptr.vmem [resolvable:$true] %s14
      %17 = dma.hbm_to_vmem [thread:$0]  %s0, 16, %s15, [#allocation3]
    $region5: #{tpu_custom_call.1} parent=1 // pred_fallthru
      _
    // Predicated region
    $region6: #{tpu_custom_call.1} parent=1 // pred_check
      _
    $region7: #{tpu_custom_call.1} parent=1 // pred_check_branch
      %19 = sbr.rel (0) target = $region9
    $region8: #{tpu_custom_call.1} parent=1 // pred_region
      %20 = dma.done [#allocation3], 16
    $region9: #{tpu_custom_call.1} parent=1 // pred_fallthru
      _
    %v21 = vld [vmem:[#allocation2] sm:$0x1]
    %v23 = vlaneseq
    %v24 = vshrl.u32 %v23, 7
    %v25 = vsub.s32 0, %v24
    %v26 = vrot.slane %v21, %v25
    %28 = vst [vmem:[#allocation5] sm:$0xf] %v26
    // Predicated region
    $region10: #{tpu_custom_call.1} parent=1 // pred_check
      _
    $region11: #{tpu_custom_call.1} parent=1 // pred_check_branch
      %30 = sbr.rel (0) target = $region13
    $region12: #{tpu_custom_call.1} parent=1 // pred_region
      %s32 = ssub.s32 64, 64
      %33 = vsyncadd [#allocation4], %s32
      %s35 = sshll.u32 [#allocation5], 4
      %s36 = int_to_ptr.vmem [resolvable:$true] %s35
      %38 = dma.vmem_to_hbm [thread:$0]  %s36, 64, %s1, [#allocation4]
    $region13: #{tpu_custom_call.1} parent=1 // pred_fallthru
      _
    // Predicated region
    $region14: #{tpu_custom_call.1} parent=1 // pred_check
      _
    $region15: #{tpu_custom_call.1} parent=1 // pred_check_branch
      %40 = sbr.rel (0) target = $region17
    $region16: #{tpu_custom_call.1} parent=1 // pred_region
      %41 = dma.done [#allocation4], 64
    $region17: #{tpu_custom_call.1} parent=1 // pred_fallthru
      _
    %42 = vsyncpa [#allocation3], 1
    %43 = vsyncpa [#allocation4], 1

</llo_original>
